<compile_context>
chip_gen: v5e
topology: v5e:2x2
jax: 0.10.0
libtpu: 0.0.40
codegen_flags: <defaults>
</compile_context>

<pallas_src>
import jax
import jax.numpy as jnp
from jax.experimental import pallas as pl
from jax.experimental.pallas import tpu as pltpu


def _conv1d_bn_kernel(x_ref, w_ref, b_ref, o_ref):
    """One (bag, L-tile) step: BN-folded pointwise conv + ReLU.

    x_ref: (C_in,  TL)   lane-dense spatial tile of one bag
    w_ref: (C_out, C_in) BN-folded conv weight (VMEM-resident across grid)
    b_ref: (C_out, 1)    BN-folded bias (f32)
    o_ref: (C_out, TL)
    """
    # Pointwise Conv1d == channel contraction on the MXU, f32 accumulation.
    y = jnp.dot(w_ref[...], x_ref[...], preferred_element_type=jnp.float32)
    y = y + b_ref[...]                                 # broadcast over lanes
    # Dropout(eval) = identity.
    o_ref[...] = jnp.maximum(y, 0.0).astype(o_ref.dtype)


def _choose_lane_tile(L, C_in, C_out, x_itemsize, out_itemsize,
                      *, tl_max=2048, vmem_block_budget=8 * 1024 * 1024):
    """Largest 128-multiple lane tile whose double-buffered x/out blocks fit budget.

    The 8 MiB budget stays comfortably inside every generation's default scoped
    VMEM (v5e: 16 MiB, v6e/v7x: 32 MiB) with room for the resident weights.
    """
    per_lane_bytes = 2 * (C_in * x_itemsize + C_out * out_itemsize)  # 2x = double-buffer
    cap = max(128, (vmem_block_budget // per_lane_bytes) // 128 * 128)
    l_cover = max(128, pl.cdiv(L, 128) * 128)          # no point exceeding L (rounded)
    tl_max = max(128, (tl_max // 128) * 128)
    return min(tl_max, cap, l_cover)


def conv1d_bn_forward(x, w, b, gamma, beta, running_mean, running_var,
                      *, eps=1e-5, use_bn=True, tl_max=2048, out_dtype=None):
    """x: (B, C_in, L). Returns (B, C_out, L) in out_dtype (default: x.dtype)."""
    B, C_in, L = x.shape
    C_out = w.shape[0]
    out_dtype = x.dtype if out_dtype is None else out_dtype

    # Fold eval-mode BatchNorm1d into the conv weight/bias (exact algebraically):
    #   BN(Wx + b) = scale*(Wx + b) + shift = (scale*W) x + (scale*b + shift)
    w32 = w.reshape(C_out, C_in).astype(jnp.float32)
    b32 = b.astype(jnp.float32)
    if use_bn:
        scale = gamma.astype(jnp.float32) / jnp.sqrt(
            running_var.astype(jnp.float32) + jnp.float32(eps))
        shift = beta.astype(jnp.float32) - running_mean.astype(jnp.float32) * scale
        w_fold = w32 * scale[:, None]
        b_fold = b32 * scale + shift
    else:  # use_bn=False -> Identity norm layer
        w_fold, b_fold = w32, b32

    # MXU inputs in the activation dtype (bf16 x -> bf16 W, f32 accumulation);
    # bias / epilogue stay f32 (v5e VPU has no bf16).
    w_fold = w_fold.astype(x.dtype)
    b_fold = b_fold.reshape(C_out, 1)

    tl = _choose_lane_tile(L, C_in, C_out, x.dtype.itemsize,
                           jnp.dtype(out_dtype).itemsize, tl_max=tl_max)
    grid = (B, pl.cdiv(L, tl))      # no host-side pad: ragged last block is masked

    out = pl.pallas_call(
        _conv1d_bn_kernel,
        out_shape=jax.ShapeDtypeStruct((B, C_out, L), out_dtype),
        grid=grid,
        in_specs=[
            # x tile: one bag (squeezed), full channel depth, lane-dense L tile.
            pl.BlockSpec((None, C_in, tl), lambda bi, li: (bi, 0, li)),
            # Folded weight / bias: constant block index -> stay resident in VMEM.
            pl.BlockSpec((C_out, C_in), lambda bi, li: (0, 0)),
            pl.BlockSpec((C_out, 1), lambda bi, li: (0, 0)),
        ],
        out_specs=pl.BlockSpec((None, C_out, tl), lambda bi, li: (bi, 0, li)),
        compiler_params=pltpu.CompilerParams(
            # No reduction axis: both grid axes independent -> full pipelining and
            # megacore sharding of (bag, L-tile) steps on v7x.
            dimension_semantics=("parallel", "parallel"),
        ),
    )(x, w_fold, b_fold)
    return out


def reference_forward(x, w, b, gamma, beta, running_mean, running_var,
                      *, eps=1e-5, use_bn=True):
    """Pure-JAX reference mirroring torch Conv1d(k=1)+BatchNorm1d(eval)+ReLU+Dropout(eval)."""
    y = jnp.einsum("oc,bcl->bol", w, x) + b[None, :, None]
    if use_bn:
        inv = gamma / jnp.sqrt(running_var + eps)
        y = (y - running_mean[None, :, None]) * inv[None, :, None] + beta[None, :, None]
    return jnp.maximum(y, 0.0)


if __name__ == "__main__":
    B, C_IN, C_OUT, L = 2, 16, 32, 256   # bags, in_channels, out_channels, length

    key = jax.random.PRNGKey(0)
    kx, kw, kb, kg, kbe, km, kv = jax.random.split(key, 7)

    x = jax.random.normal(kx, (B, C_IN, L), jnp.float32)

    # Conv1d(kernel_size=1) parameters (torch default-ish uniform init).
    bound = 1.0 / jnp.sqrt(jnp.float32(C_IN))
    w = jax.random.uniform(kw, (C_OUT, C_IN), jnp.float32, -bound, bound)
    b = jax.random.uniform(kb, (C_OUT,), jnp.float32, -bound, bound)

    # BatchNorm1d running statistics + affine params (eval mode).
    gamma = 1.0 + 0.1 * jax.random.normal(kg, (C_OUT,), jnp.float32)
    beta = 0.1 * jax.random.normal(kbe, (C_OUT,), jnp.float32)
    running_mean = 0.1 * jax.random.normal(km, (C_OUT,), jnp.float32)
    running_var = jnp.abs(1.0 + 0.1 * jax.random.normal(kv, (C_OUT,), jnp.float32))

    # 1) Main check (even L tiles).
    out = conv1d_bn_forward(x, w, b, gamma, beta, running_mean, running_var)
    out = jax.block_until_ready(out)
    ref = reference_forward(x, w, b, gamma, beta, running_mean, running_var)
    assert out.shape == (B, C_OUT, L), out.shape
    assert jnp.allclose(out, ref, atol=1e-5, rtol=1e-5), \
        float(jnp.max(jnp.abs(out - ref)))

    # 2) Ragged-L check: L not a multiple of the lane tile -> exercises the
    #    masked trailing block (no host-side padding copy).
    L2 = 200
    x2 = jax.random.normal(kx, (B, C_IN, L2), jnp.float32)
    out2 = jax.block_until_ready(
        conv1d_bn_forward(x2, w, b, gamma, beta, running_mean, running_var))
    ref2 = reference_forward(x2, w, b, gamma, beta, running_mean, running_var)
    assert out2.shape == (B, C_OUT, L2), out2.shape
    assert jnp.allclose(out2, ref2, atol=1e-5, rtol=1e-5), \
        float(jnp.max(jnp.abs(out2 - ref2)))

    # 3) use_bn=False (Identity norm layer) path.
    out3 = jax.block_until_ready(
        conv1d_bn_forward(x, w, b, gamma, beta, running_mean, running_var,
                          use_bn=False))
    ref3 = reference_forward(x, w, b, gamma, beta, running_mean, running_var,
                             use_bn=False)
    assert jnp.allclose(out3, ref3, atol=1e-5, rtol=1e-5), \
        float(jnp.max(jnp.abs(out3 - ref3)))

    print("KERNEL_OK")
</pallas_src>

<mosaic_0001>
module attributes {stable_mosaic.version = 11 : i64} {
  func.func @_conv1d_bn_kernel(%arg0: i32, %arg1: i32, %arg2: memref<1x16x256xf32, #tpu.memory_space<vmem>>, %arg3: memref<32x16xf32, #tpu.memory_space<vmem>>, %arg4: memref<32x1xf32, #tpu.memory_space<vmem>>, %arg5: memref<1x32x256xf32, #tpu.memory_space<vmem>>) attributes {dimension_semantics = [#tpu.dimension_semantics<parallel>, #tpu.dimension_semantics<parallel>], iteration_bounds = array<i64: 2, 1>, scalar_prefetch = 0 : i64, scratch_operands = 0 : i64, tpu.core_type = #tpu.core_type<tc>, window_params = [{transform_indices = @transform_0, window_bounds = array<i64: 1, 16, 256>}, {pipeline_mode = #tpu.pipeline_mode<synchronous>, transform_indices = @transform_1, window_bounds = array<i64: 32, 16>}, {pipeline_mode = #tpu.pipeline_mode<synchronous>, transform_indices = @transform_2, window_bounds = array<i64: 32, 1>}, {transform_indices = @transform_3, window_bounds = array<i64: 1, 32, 256>}]} {
    %c0 = arith.constant 0 : index
    %c0_0 = arith.constant 0 : index
    %0 = vector.load %arg3[%c0, %c0_0] : memref<32x16xf32, #tpu.memory_space<vmem>>, vector<32x16xf32>
    %c0_1 = arith.constant 0 : index
    %c0_2 = arith.constant 0 : index
    %c0_3 = arith.constant 0 : index
    %1 = vector.load %arg2[%c0_1, %c0_2, %c0_3] : memref<1x16x256xf32, #tpu.memory_space<vmem>>, vector<1x16x256xf32>
    %2 = vector.shape_cast %1 : vector<1x16x256xf32> to vector<16x256xf32>
    %cst = arith.constant dense<0.000000e+00> : vector<32x256xf32>
    %3 = tpu.matmul %0, %2, %cst {dimension_numbers = #tpu.dot_dimension_numbers<[1], [0], [0], [1], [0, 0, 1, 1], [], []>} : vector<32x16xf32>, vector<16x256xf32>, vector<32x256xf32> -> vector<32x256xf32>
    %c0_4 = arith.constant 0 : index
    %c0_5 = arith.constant 0 : index
    %4 = vector.load %arg4[%c0_4, %c0_5] : memref<32x1xf32, #tpu.memory_space<vmem>>, vector<32x1xf32>
    %5 = vector.broadcast %4 : vector<32x1xf32> to vector<32x256xf32>
    %6 = arith.addf %3, %5 : vector<32x256xf32>
    %cst_6 = arith.constant 0.000000e+00 : f32
    %7 = vector.broadcast %cst_6 : f32 to vector<32x256xf32>
    %8 = arith.maximumf %6, %7 : vector<32x256xf32>
    %c0_7 = arith.constant 0 : index
    %c0_8 = arith.constant 0 : index
    %c0_9 = arith.constant 0 : index
    %9 = vector.load %arg5[%c0_7, %c0_8, %c0_9] : memref<1x32x256xf32, #tpu.memory_space<vmem>>, vector<1x32x256xf32>
    %10 = vector.shape_cast %9 : vector<1x32x256xf32> to vector<32x256xf32>
    %11 = vector.shape_cast %8 : vector<32x256xf32> to vector<1x32x256xf32>
    tpu.vector_store %arg5[%c0_7, %c0_8, %c0_9], %11 {strides = array<i32>} : memref<1x32x256xf32, #tpu.memory_space<vmem>>, vector<1x32x256xf32>,
    return
  }
  func.func @transform_0(%arg0: i32, %arg1: i32) -> (i32, i32, i32) {
    %c0_i32 = arith.constant 0 : i32
    %c0_i32_0 = arith.constant 0 : i32
    return %arg0, %c0_i32, %arg1 : i32, i32, i32
  }
  func.func @transform_1(%arg0: i32, %arg1: i32) -> (i32, i32) {
    %c0_i32 = arith.constant 0 : i32
    %c0_i32_0 = arith.constant 0 : i32
    %c0_i32_1 = arith.constant 0 : i32
    return %c0_i32, %c0_i32_0 : i32, i32
  }
  func.func @transform_2(%arg0: i32, %arg1: i32) -> (i32, i32) {
    %c0_i32 = arith.constant 0 : i32
    %c0_i32_0 = arith.constant 0 : i32
    %c0_i32_1 = arith.constant 0 : i32
    return %c0_i32, %c0_i32_0 : i32, i32
  }
  func.func @transform_3(%arg0: i32, %arg1: i32) -> (i32, i32, i32) {
    %c0_i32 = arith.constant 0 : i32
    %c0_i32_0 = arith.constant 0 : i32
    return %arg0, %c0_i32, %arg1 : i32, i32, i32
  }
}

</mosaic_0001>

<llo_original>
// kernel: tpu_custom_call.1
$region0: #{tpu_custom_call.1}
  #allocation0 [shape = 'u32[]', space=smem, size = 0x4, offset = 0x4, fixed_abs, tag = 'smem constant byte address 0x4 - core index']
  #allocation1 [shape = 'u32[72,128]{1,0:T(1,128)}', space=vmem, size = 0x9000, scoped, tag = 'internal scratch']
  %s0 = inlined_call_operand.vmem [shape: f32[2,16,256], index: 0, kind: input, shape index: {}]
  %s1 = inlined_call_operand.vmem [shape: f32[32,16], index: 1, kind: input, shape index: {}]
  %s2 = inlined_call_operand.vmem [shape: f32[32,1], index: 2, kind: input, shape index: {}]
  %s3 = inlined_call_operand.hbm [shape: f32[2,32,256], index: 3, kind: output, shape index: {}]
  %s4 = sld [smem:[#allocation0]]
  $region45: #{tpu_custom_call.1} parent=0
    _
  %s6 = ssub.s32 1, %s4
  %s7 = scalar_select 0, %s6, %s4
  $region1: #{tpu_custom_call.1} parent=0
    #allocation2 [shape = 'u8[65536]{0}', space=vmem, size = 0x10000, scoped, tag = 'output window, operand 0']
    #allocation3 [shape = 's32[2]{0}', space=sflag, size = 0x8, scoped, tag = 'scoped memory for tpu_custom_call.1']
    %8 = vsyncpa [#allocation3], 0
    %s9 = scalar_lea.sflag [#allocation3], 1
    %10 = vsyncpa %s9, 0
    loop: start=0, step=1, limit=4
    $region2: #{tpu_custom_call.1} parent=1 // loop_pre_header
      _
    $region3: #{tpu_custom_call.1} parent=1 // loop_header
      %s12 = sphi 0, %s16
      %p13 = scmp.ge.s32.totalorder %s12, 4
      %s19 = sphi 0, %s31
      %s20 = sphi 0, %s27
      %s21 = sphi 0, %s19
      %s22 = sphi 0, %s20
      %s23 = sphi 0, %s21
      %s24 = sphi 0, %s22
      %s36 = sphi 0, %s38
      %s39 = sphi 0, %s36
      %s40 = sphi 0, %s39
      %s56 = sphi 0, %s40
      %s60 = sphi 0, %s60
      %s62 = sphi 0, %s60
      %s63 = sphi 0, %s62
      %s77 = sphi 0, %s63
      %s81 = sphi 0, %s81
      %s83 = sphi 0, %s81
      %s84 = sphi 0, %s83
      %s98 = sphi 0, %s84
      %s106 = sphi 0, %s108
      %s109 = sphi 0, %s106
      %s110 = sphi 0, %s109
      %s126 = sphi 0, %s110
    $region4: #{tpu_custom_call.1} parent=1 // loop_header_branch
      %15 = sbr.rel (%p13) target = $region8
    $region5: #{tpu_custom_call.1} parent=1 // loop_body
      %s17 = ssub.s32 %s12, 1
      %s18 = ssub.s32 %s12, 2
      %s25 = sadd.s32 1, %s20
      %p26 = scmp.ge.s32.totalorder %s25, 1
      %s27 = scalar_select %p26, 0, %s25
      %s28 = sadd.s32 1, %s19
      %s29 = scalar_select %p26, %s28, %s19
      %p30 = scmp.ge.s32.totalorder %s29, 2
      %s31 = scalar_select %p30, 0, %s29
      %s32 = ssub.s32 %s19, %s31
      %s33 = ssub.s32 %s20, %s27
      %s34 = sor.u32 %s32, %s33
      %p35 = scmp.eq.s32.totalorder %s34, 0
      %s37 = sadd.s32 %s36, 1
      %s38 = scalar_select %p35, %s36, %s37
      %p41 = pneg %p35
      %p42 = scmp.eq.s32.totalorder %s12, 1
      %p43 = por %p41, %p42
      %p44 = scmp.ne.s32.totalorder %s36, %s39
      %p45 = scmp.eq.s32.totalorder %s12, 0
      %p46 = por %p44, %p45
      %p47 = scmp.ne.s32.totalorder %s36, %s39
      %p48 = scmp.eq.s32.totalorder %s17, 1
      %p49 = por %p47, %p48
      %p50 = scmp.ne.s32.totalorder %s39, %s40
      %p51 = scmp.eq.s32.totalorder %s17, 0
      %p52 = por %p50, %p51
      %p53 = scmp.ne.s32.totalorder %s39, %s40
      %p54 = scmp.eq.s32.totalorder %s18, 1
      %p55 = por %p53, %p54
      %p57 = scmp.ne.s32.totalorder %s40, %s56
      %p58 = scmp.eq.s32.totalorder %s18, 0
      %p59 = por %p57, %p58
      %s61 = sadd.s32 %s60, 1
      %p64 = scmp.eq.s32.totalorder %s12, 1
      %p65 = scmp.ne.s32.totalorder %s60, %s62
      %p66 = scmp.eq.s32.totalorder %s12, 0
      %p67 = por %p65, %p66
      %p68 = scmp.ne.s32.totalorder %s60, %s62
      %p69 = scmp.eq.s32.totalorder %s17, 1
      %p70 = por %p68, %p69
      %p71 = scmp.ne.s32.totalorder %s62, %s63
      %p72 = scmp.eq.s32.totalorder %s17, 0
      %p73 = por %p71, %p72
      %p74 = scmp.ne.s32.totalorder %s62, %s63
      %p75 = scmp.eq.s32.totalorder %s18, 1
      %p76 = por %p74, %p75
      %p78 = scmp.ne.s32.totalorder %s63, %s77
      %p79 = scmp.eq.s32.totalorder %s18, 0
      %p80 = por %p78, %p79
      %s82 = sadd.s32 %s81, 1
      %p85 = scmp.eq.s32.totalorder %s12, 1
      %p86 = scmp.ne.s32.totalorder %s81, %s83
      %p87 = scmp.eq.s32.totalorder %s12, 0
      %p88 = por %p86, %p87
      %p89 = scmp.ne.s32.totalorder %s81, %s83
      %p90 = scmp.eq.s32.totalorder %s17, 1
      %p91 = por %p89, %p90
      %p92 = scmp.ne.s32.totalorder %s83, %s84
      %p93 = scmp.eq.s32.totalorder %s17, 0
      %p94 = por %p92, %p93
      %p95 = scmp.ne.s32.totalorder %s83, %s84
      %p96 = scmp.eq.s32.totalorder %s18, 1
      %p97 = por %p95, %p96
      %p99 = scmp.ne.s32.totalorder %s84, %s98
      %p100 = scmp.eq.s32.totalorder %s18, 0
      %p101 = por %p99, %p100
      %s102 = ssub.s32 %s19, %s31
      %s103 = ssub.s32 %s20, %s27
      %s104 = sor.u32 %s102, %s103
      %p105 = scmp.eq.s32.totalorder %s104, 0
      %s107 = sadd.s32 %s106, 1
      %s108 = scalar_select %p105, %s106, %s107
      %p111 = pneg %p105
      %p112 = scmp.eq.s32.totalorder %s12, 1
      %p113 = por %p111, %p112
      %p114 = scmp.ne.s32.totalorder %s106, %s109
      %p115 = scmp.eq.s32.totalorder %s12, 0
      %p116 = por %p114, %p115
      %p117 = scmp.ne.s32.totalorder %s106, %s109
      %p118 = scmp.eq.s32.totalorder %s17, 1
      %p119 = por %p117, %p118
      %p120 = scmp.ne.s32.totalorder %s109, %s110
      %p121 = scmp.eq.s32.totalorder %s17, 0
      %p122 = por %p120, %p121
      %p123 = scmp.ne.s32.totalorder %s109, %s110
      %p124 = scmp.eq.s32.totalorder %s18, 1
      %p125 = por %p123, %p124
      %p127 = scmp.ne.s32.totalorder %s110, %s126
      %p128 = scmp.eq.s32.totalorder %s18, 0
      %p129 = por %p127, %p128
      %p130 = scmp.le.s32.totalorder 1, %s12
      %p131 = scmp.lt.s32.totalorder %s12, 3
      %p132 = pnand %p130, %p131
      %p133 = pneg %p132
      // Predicated region
      $region9: #{tpu_custom_call.1} parent=5 // pred_check
        _
      $region10: #{tpu_custom_call.1} parent=5 // pred_check_branch
        %135 = sbr.rel (%p132) target = $region12
      $region11: #{tpu_custom_call.1} parent=5 // pred_region
        %s136 = ssub.s32 %s12, 1
        // Predicated region
        $region13: #{tpu_custom_call.1} parent=11 // pred_check
          %p137 = pneg %p73
        $region14: #{tpu_custom_call.1} parent=11 // pred_check_branch
          %139 = sbr.rel (%p137) target = $region16
        $region15: #{tpu_custom_call.1} parent=11 // pred_region
          _
        $region16: #{tpu_custom_call.1} parent=11 // pred_fallthru
          _
        // Predicated region
        $region17: #{tpu_custom_call.1} parent=11 // pred_check
          %p140 = pneg %p94
        $region18: #{tpu_custom_call.1} parent=11 // pred_check_branch
          %142 = sbr.rel (%p140) target = $region20
        $region19: #{tpu_custom_call.1} parent=11 // pred_region
          _
        $region20: #{tpu_custom_call.1} parent=11 // pred_fallthru
          _
      $region12: #{tpu_custom_call.1} parent=5 // pred_fallthru
        _
      %p143 = scmp.lt.s32.totalorder %s12, 2
      // Predicated region
      $region21: #{tpu_custom_call.1} parent=5 // pred_check
        %p144 = pneg %p143
      $region22: #{tpu_custom_call.1} parent=5 // pred_check_branch
        %146 = sbr.rel (%p144) target = $region24
      $region23: #{tpu_custom_call.1} parent=5 // pred_region
        // Predicated region
        $region25: #{tpu_custom_call.1} parent=23 // pred_check
          %p147 = pneg %p46
        $region26: #{tpu_custom_call.1} parent=23 // pred_check_branch
          %149 = sbr.rel (%p147) target = $region28
        $region27: #{tpu_custom_call.1} parent=23 // pred_region
          %s150 = smul.u32 2, %s20
          %p151 = scmp.lt.s32.totalorder %s19, 1
          %s152 = scalar_select %p151, %s19, 1
          %p153 = scmp.lt.s32.totalorder %s150, 1
          %s154 = scalar_select %p153, %s150, 1
          %s155 = smul.addr %s152, 4
          %s156 = sadd.s32 %s154, %s155
          %s157 = smul.addr %s156, 8
          %s158 = scalar_lea.vmem %s0, %s157
          %s159 = smul.u32 2, %s20
        $region28: #{tpu_custom_call.1} parent=23 // pred_fallthru
          _
      $region24: #{tpu_custom_call.1} parent=5 // pred_fallthru
        _
      %p160 = scmp.le.s32.totalorder 1, %s12
      %p161 = scmp.lt.s32.totalorder %s12, 3
      %p162 = pnand %p160, %p161
      %p163 = pneg %p162
      // Predicated region
      $region29: #{tpu_custom_call.1} parent=5 // pred_check
        _
      $region30: #{tpu_custom_call.1} parent=5 // pred_check_branch
        %165 = sbr.rel (%p162) target = $region32
      $region31: #{tpu_custom_call.1} parent=5 // pred_region
        %s166 = ssub.s32 %s12, 1
        %s167 = smul.u32 2, %s22
        %p168 = scmp.lt.s32.totalorder %s21, 1
        %s169 = scalar_select %p168, %s21, 1
        %p170 = scmp.lt.s32.totalorder %s167, 1
        %s171 = scalar_select %p170, %s167, 1
        %s172 = smul.addr %s169, 4
        %s173 = sadd.s32 %s171, %s172
        %s174 = smul.addr %s173, 8
        %s175 = scalar_lea.vmem %s0, %s174
        %p176 = pneg %p52
        %p177 = pneg %p49
        %p178 = pneg %p73
        %p179 = pneg %p70
        %p180 = pneg %p94
        %p181 = pneg %p91
        %p182 = pneg %p122
        %p183 = pneg %p119
        %s184 = sand.u32 %s109, 1
        %s185 = scalar_lea.sflag [#allocation3], %s184
        %s186 = sand.u32 %s109, 1
        %s187 = smul.addr %s186, 64
        %s188 = scalar_lea.vmem [#allocation2], %s187
        %s189 = smul.u32 2, %s22
        %p190 = scmp.lt.s32.totalorder %s21, 1
        %s191 = scalar_select %p190, %s21, 1
        %p192 = scmp.lt.s32.totalorder %s189, 1
        %s193 = scalar_select %p192, %s189, 1
        %s194 = smul.addr %s191, 4
        %s195 = sadd.s32 %s193, %s194
        %s196 = smul.addr %s195, 8
        %s197 = scalar_lea.vmem %s0, %s196
        %s198 = smul.u32 2, %s22
        %s199 = smul.u32 2, %s22
        %v200 = vld [vmem:[%s1] sm:$0xff]
        %v201 = vld [vmem:[%s1 + $0x8] sm:$0xff]
        %v202 = vld [vmem:[%s1 + $0x10] sm:$0xff]
        %v203 = vld [vmem:[%s1 + $0x18] sm:$0xff]
        %v204 = vld [vmem:[%s197] sm:$0xff]
        %v205 = vld [vmem:[%s197 + $0x8] sm:$0xff]
        %v206 = vld [vmem:[%s197 + $0x10] sm:$0xff]
        %v207 = vld [vmem:[%s197 + $0x18] sm:$0xff]
        %v208 = vld [vmem:[%s2] sm:$0xff]
        %v209 = vld [vmem:[%s2 + $0x8] sm:$0xff]
        %v210 = vld [vmem:[%s2 + $0x10] sm:$0xff]
        %v211 = vld [vmem:[%s2 + $0x18] sm:$0xff]
        %213 = vset.pattern.permute.xlu0 0
        %214 = vperm.xlu0 %213, %v208
        %v215 = vpop.permute.xlu0 %214
        %218 = vset.pattern.permute.xlu0 0
        %219 = vperm.xlu0 %218, %v209
        %v220 = vpop.permute.xlu0 %219
        %223 = vset.pattern.permute.xlu0 0
        %224 = vperm.xlu0 %223, %v210
        %v225 = vpop.permute.xlu0 %224
        %228 = vset.pattern.permute.xlu0 0
        %229 = vperm.xlu0 %228, %v211
        %v230 = vpop.permute.xlu0 %229
        %vm232 = vcmask 130048
        %v234 = vsel %vm232, %v200, 0
        %v237 = vsel %vm232, %v201, 0
        %v240 = vsel %vm232, %v202, 0
        %v243 = vsel %vm232, %v203, 0
        %245 = vmatpush.msra.mxu0 0.0
        %246 = vmatpush.msra.mxu0 0.0
        %247 = vmatpush.msra.mxu0 0.0
        %248 = vmatpush.msra.mxu0 0.0
        %249 = vmatpush.msra.mxu0 0.0
        %250 = vmatpush.msra.mxu0 0.0
        %251 = vmatpush.msra.mxu0 0.0
        %252 = vmatpush.msra.mxu0 0.0
        %253 = vmatpush.msra.mxu0 0.0
        %254 = vmatpush.msra.mxu0 0.0
        %255 = vmatpush.msra.mxu0 0.0
        %256 = vmatpush.msra.mxu0 0.0
        %257 = vmatpush.msra.mxu0 0.0
        %258 = vmatpush.msra.mxu0 0.0
        %259 = vmatpush.msra.mxu0 %v206
        %260 = vmatpush.msra.mxu0 %v204
        %261 = vmatmul.f32.gmra.mxu0 %v234
        %v262 = vpop.f32.mrf.mxu0
        %v263 = vadd.f32 %v215, %v262
        %264 = vmatmul.f32.gmra.mxu0 %v237
        %v265 = vpop.f32.mrf.mxu0
        %v266 = vadd.f32 %v220, %v265
        %267 = vmatmul.f32.gmra.mxu0 %v240
        %v268 = vpop.f32.mrf.mxu0
        %v269 = vadd.f32 %v225, %v268
        %270 = vmatmul.f32.gmra.mxu0 %v243
        %v271 = vpop.f32.mrf.mxu0
        %v272 = vadd.f32 %v230, %v271
        %273 = vdwg.mxu0
        %274 = vmatpush.msra.mxu0 0.0
        %275 = vmatpush.msra.mxu0 0.0
        %276 = vmatpush.msra.mxu0 0.0
        %277 = vmatpush.msra.mxu0 0.0
        %278 = vmatpush.msra.mxu0 0.0
        %279 = vmatpush.msra.mxu0 0.0
        %280 = vmatpush.msra.mxu0 0.0
        %281 = vmatpush.msra.mxu0 0.0
        %282 = vmatpush.msra.mxu0 0.0
        %283 = vmatpush.msra.mxu0 0.0
        %284 = vmatpush.msra.mxu0 0.0
        %285 = vmatpush.msra.mxu0 0.0
        %286 = vmatpush.msra.mxu0 0.0
        %287 = vmatpush.msra.mxu0 0.0
        %288 = vmatpush.msra.mxu0 %v207
        %289 = vmatpush.msra.mxu0 %v205
        %290 = vmatmul.f32.gmra.mxu0 %v234
        %v291 = vpop.f32.mrf.mxu0
        %v292 = vadd.f32 %v215, %v291
        %293 = vmatmul.f32.gmra.mxu0 %v237
        %v294 = vpop.f32.mrf.mxu0
        %v295 = vadd.f32 %v220, %v294
        %296 = vmatmul.f32.gmra.mxu0 %v240
        %v297 = vpop.f32.mrf.mxu0
        %v298 = vadd.f32 %v225, %v297
        %299 = vmatmul.f32.gmra.mxu0 %v243
        %v300 = vpop.f32.mrf.mxu0
        %v301 = vadd.f32 %v230, %v300
        %302 = vdwg.mxu0
        %v303 = vmax.f32 %v263, 0.0
        %v304 = vmax.f32 %v292, 0.0
        %v305 = vmax.f32 %v266, 0.0
        %v306 = vmax.f32 %v295, 0.0
        %v307 = vmax.f32 %v269, 0.0
        %v308 = vmax.f32 %v298, 0.0
        %v309 = vmax.f32 %v272, 0.0
        %v310 = vmax.f32 %v301, 0.0
        %311 = vst [vmem:[%s188] sm:$0xff] %v303
        %312 = vst [vmem:[%s188 + $0x8] sm:$0xff] %v304
        %313 = vst [vmem:[%s188 + $0x10] sm:$0xff] %v305
        %314 = vst [vmem:[%s188 + $0x18] sm:$0xff] %v306
        %315 = vst [vmem:[%s188 + $0x20] sm:$0xff] %v307
        %316 = vst [vmem:[%s188 + $0x28] sm:$0xff] %v308
        %317 = vst [vmem:[%s188 + $0x30] sm:$0xff] %v309
        %318 = vst [vmem:[%s188 + $0x38] sm:$0xff] %v310
        %s319 = sand.u32 %s109, 1
        %s320 = scalar_lea.sflag [#allocation3], %s319
        %s321 = sand.u32 %s109, 1
        %s322 = smul.addr %s321, 64
        %s323 = scalar_lea.vmem [#allocation2], %s322
        // Predicated region
        $region33: #{tpu_custom_call.1} parent=31 // pred_check
          %p324 = pneg %p119
        $region34: #{tpu_custom_call.1} parent=31 // pred_check_branch
          %326 = sbr.rel (%p324) target = $region36
        $region35: #{tpu_custom_call.1} parent=31 // pred_region
          %s327 = smul.u32 2, %s22
          %329 = vsyncadd %s320, 0
          %s330 = smul.addr %s21, 8
          %s331 = sadd.s32 %s327, %s330
          %s332 = smul.addr %s331, 8
          %s333 = scalar_lea.hbm %s3, %s332
          %s334 = sshll.u32 %s323, 4
          %s335 = int_to_ptr.vmem [resolvable:$true] %s334
          %s336 = sshll.u32 %s333, 4
          %s337 = int_to_ptr.hbm [resolvable:$true] %s336
          %342 = dma.vmem_to_hbm [thread:$0]  %s335, 1024, %s337, %s320, 256, 256, 16
        $region36: #{tpu_custom_call.1} parent=31 // pred_fallthru
          _
      $region32: #{tpu_custom_call.1} parent=5 // pred_fallthru
        _
      %p343 = scmp.le.s32.totalorder 2, %s12
      // Predicated region
      $region37: #{tpu_custom_call.1} parent=5 // pred_check
        %p344 = pneg %p343
      $region38: #{tpu_custom_call.1} parent=5 // pred_check_branch
        %346 = sbr.rel (%p344) target = $region40
      $region39: #{tpu_custom_call.1} parent=5 // pred_region
        %s347 = ssub.s32 %s12, 2
        // Predicated region
        $region41: #{tpu_custom_call.1} parent=39 // pred_check
          %p348 = pneg %p125
        $region42: #{tpu_custom_call.1} parent=39 // pred_check_branch
          %350 = sbr.rel (%p348) target = $region44
        $region43: #{tpu_custom_call.1} parent=39 // pred_region
          %s351 = sand.u32 %s110, 1
          %s352 = scalar_lea.sflag [#allocation3], %s351
          %s353 = sand.u32 %s110, 1
          %s354 = smul.addr %s353, 64
          %s355 = scalar_lea.vmem [#allocation2], %s354
          %357 = dma.done %s352, 1024
        $region44: #{tpu_custom_call.1} parent=39 // pred_fallthru
          _
      $region40: #{tpu_custom_call.1} parent=5 // pred_fallthru
        _
    $region6: #{tpu_custom_call.1} parent=1 // loop_footer
      %s16 = sadd.s32 1, %s12
    $region7: #{tpu_custom_call.1} parent=1 // loop_footer_branch
      %11 = sbr.rel target = $region3
    $region8: #{tpu_custom_call.1} parent=1 // loop_exit
      _
    %358 = vsyncpa [#allocation3], 1
    %s359 = scalar_lea.sflag [#allocation3], 1
    %360 = vsyncpa %s359, 1

</llo_original>
